<compile_context>
chip_gen: v5e
topology: v5e:2x2
jax: 0.10.0
libtpu: 0.0.40
codegen_flags: <defaults>
</compile_context>

<pallas_src>
import jax
import jax.numpy as jnp
from jax.experimental import pallas as pl
from jax.experimental.pallas import tpu as pltpu

LANES = 128
MAX_BLOCK_ROWS = 8192            # (8192, 128) f32 = 4 MiB / input / buffer
MIN_GRID_BLOCKS = 4              # keep megacore + pipelining fed
SMALL_INPUT_THRESHOLD = 1 << 20  # below this, fused XLA reduce beats a kernel


def _round_up(x, m):
    return ((x + m - 1) // m) * m


def _make_partial_kernel(block_rows, num_blocks, valid_rows_last):
    """Per-block partial sum of squared diffs; all sizes are static Python ints."""
    needs_mask = valid_rows_last < block_rows
    last_block = num_blocks - 1

    def kernel(p_ref, t_ref, o_ref):
        d = p_ref[...].astype(jnp.float32) - t_ref[...].astype(jnp.float32)
        sq = d * d

        if not needs_mask:
            # Every block is full: pure VPU work, no iota/compare/select.
            o_ref[...] = jnp.sum(sq, axis=0, keepdims=True)[None]
        else:
            i = pl.program_id(0)

            @pl.when(i != last_block)
            def _():
                o_ref[...] = jnp.sum(sq, axis=0, keepdims=True)[None]

            @pl.when(i == last_block)
            def _():
                # Mask out padded / garbage rows of the partial last block.
                row_ids = jax.lax.broadcasted_iota(
                    jnp.int32, (block_rows, LANES), 0)
                masked = jnp.where(row_ids < valid_rows_last, sq,
                                   jnp.float32(0.0))
                o_ref[...] = jnp.sum(masked, axis=0, keepdims=True)[None]

    return kernel


def _rmse_loss_pallas(y_pred, y_true, *, max_block_rows):
    total = int(y_pred.size)

    flat_p = y_pred.reshape(-1)
    flat_t = y_true.reshape(-1)

    rem = total % LANES
    if rem:
        # Rare ragged case: pad only to the next lane boundary (<= 127 zeros,
        # excluded from the mean by dividing with the true element count).
        pad = LANES - rem
        flat_p = jnp.pad(flat_p, (0, pad))
        flat_t = jnp.pad(flat_t, (0, pad))

    rows = int(flat_p.size) // LANES
    p2 = flat_p.reshape(rows, LANES)
    t2 = flat_t.reshape(rows, LANES)

    # Sublane alignment of the row block: 8 for f32, 16 for bf16, 32 for 8-bit.
    min_itemsize = min(jnp.dtype(p2.dtype).itemsize,
                       jnp.dtype(t2.dtype).itemsize)
    row_align = 8 * max(1, 4 // max(1, min_itemsize))

    if rows <= row_align:
        block_rows = rows  # single full-extent block (always a legal tiling)
    else:
        target = pl.cdiv(rows, MIN_GRID_BLOCKS)
        block_rows = min(max_block_rows, _round_up(target, row_align))
        block_rows = min(block_rows, _round_up(rows, row_align))
    num_blocks = pl.cdiv(rows, block_rows)
    valid_rows_last = rows - (num_blocks - 1) * block_rows

    kernel = _make_partial_kernel(block_rows, num_blocks, valid_rows_last)

    bytes_in = total * (jnp.dtype(y_pred.dtype).itemsize
                        + jnp.dtype(y_true.dtype).itemsize)
    cost = pl.CostEstimate(
        flops=3 * total,
        transcendentals=0,
        bytes_accessed=bytes_in + num_blocks * LANES * 4,
    )

    # 2 inputs x 2 pipeline buffers + headroom: raises v5e's 16 MiB default,
    # stays well under v7x's 64 MiB physical VMEM.
    vmem_limit = min(4 * block_rows * LANES * 4 + (8 << 20), 48 << 20)

    partials = pl.pallas_call(
        kernel,
        out_shape=jax.ShapeDtypeStruct((num_blocks, 1, LANES), jnp.float32),
        grid=(num_blocks,),
        in_specs=[
            pl.BlockSpec((block_rows, LANES), lambda i: (i, 0)),
            pl.BlockSpec((block_rows, LANES), lambda i: (i, 0)),
        ],
        out_specs=pl.BlockSpec((1, 1, LANES), lambda i: (i, 0, 0)),
        compiler_params=pltpu.CompilerParams(
            # Independent lane-dense per-block partials -> v7x can split the
            # grid across both TensorCores; harmless on single-TC v5e/v6e.
            dimension_semantics=("parallel",),
            vmem_limit_bytes=vmem_limit,
        ),
        cost_estimate=cost,
    )(p2, t2)

    mse = jnp.sum(partials) * jnp.float32(1.0 / total)
    return jnp.sqrt(mse)


def rmse_loss(y_pred, y_true, *,
              small_input_threshold=SMALL_INPUT_THRESHOLD,
              max_block_rows=MAX_BLOCK_ROWS):
    """sqrt(mean((y_pred - y_true)^2)) — forward pass of RMSELoss."""
    assert y_pred.shape == y_true.shape, "shapes must match (MSELoss semantics)"
    total = int(y_pred.size)
    if total == 0:
        return jnp.float32(jnp.nan)  # matches torch MSELoss(mean) on empty

    if total < small_input_threshold:
        # Kernel launch + pipeline ramp dwarfs the work here; let XLA fuse it.
        d = y_pred.astype(jnp.float32) - y_true.astype(jnp.float32)
        return jnp.sqrt(jnp.mean(d * d))

    return _rmse_loss_pallas(y_pred, y_true, max_block_rows=max_block_rows)


if __name__ == "__main__":
    key = jax.random.PRNGKey(0)

    # Small shapes consistent with a forecasting output: (batch, channels, H, W).
    shape = (2, 4, 16, 16)
    k1, k2 = jax.random.split(key)
    y_pred = jax.random.normal(k1, shape, dtype=jnp.float32)
    y_true = jax.random.normal(k2, shape, dtype=jnp.float32)

    # Force the Pallas path (the small-input fallback would otherwise handle it).
    loss = rmse_loss(y_pred, y_true, small_input_threshold=0)
    jax.block_until_ready(loss)
    ref = jnp.sqrt(jnp.mean((y_pred - y_true) ** 2))
    assert jnp.allclose(loss, ref, rtol=1e-5, atol=1e-6), (loss, ref)

    # Ragged case: lane-tail pad + partial (masked) last grid block.
    shape2 = (3, 5, 33, 40)
    k3, k4 = jax.random.split(k2)
    yp2 = jax.random.normal(k3, shape2, dtype=jnp.float32)
    yt2 = jax.random.normal(k4, shape2, dtype=jnp.float32)
    loss2 = rmse_loss(yp2, yt2, small_input_threshold=0)
    jax.block_until_ready(loss2)
    ref2 = jnp.sqrt(jnp.mean((yp2 - yt2) ** 2))
    assert jnp.allclose(loss2, ref2, rtol=1e-5, atol=1e-6), (loss2, ref2)

    # Large-enough case to take the default (non-fallback) Pallas path.
    shape3 = (8, 16, 128, 128)  # 2_097_152 elements
    k5, k6 = jax.random.split(k4)
    yp3 = jax.random.normal(k5, shape3, dtype=jnp.float32)
    yt3 = jax.random.normal(k6, shape3, dtype=jnp.float32)
    loss3 = rmse_loss(yp3, yt3)
    jax.block_until_ready(loss3)
    ref3 = jnp.sqrt(jnp.mean((yp3 - yt3) ** 2))
    assert jnp.allclose(loss3, ref3, rtol=1e-5, atol=1e-6), (loss3, ref3)

    print("KERNEL_OK")
</pallas_src>

<mosaic_0001>
module attributes {stable_mosaic.version = 11 : i64} {
  func.func @kernel(%arg0: i32, %arg1: memref<8x128xf32, #tpu.memory_space<vmem>>, %arg2: memref<8x128xf32, #tpu.memory_space<vmem>>, %arg3: memref<1x1x128xf32, #tpu.memory_space<vmem>>) attributes {dimension_semantics = [#tpu.dimension_semantics<parallel>], iteration_bounds = array<i64: 2>, scalar_prefetch = 0 : i64, scratch_operands = 0 : i64, tpu.core_type = #tpu.core_type<tc>, window_params = [{transform_indices = @transform_0, window_bounds = array<i64: 8, 128>}, {transform_indices = @transform_1, window_bounds = array<i64: 8, 128>}, {transform_indices = @transform_2, window_bounds = array<i64: 1, 1, 128>}]} {
    %c0 = arith.constant 0 : index
    %c0_0 = arith.constant 0 : index
    %0 = vector.load %arg1[%c0, %c0_0] : memref<8x128xf32, #tpu.memory_space<vmem>>, vector<8x128xf32>
    %c0_1 = arith.constant 0 : index
    %c0_2 = arith.constant 0 : index
    %1 = vector.load %arg2[%c0_1, %c0_2] : memref<8x128xf32, #tpu.memory_space<vmem>>, vector<8x128xf32>
    %2 = arith.subf %0, %1 : vector<8x128xf32>
    %3 = arith.mulf %2, %2 : vector<8x128xf32>
    %cst = arith.constant dense<0.000000e+00> : vector<128xf32>
    %4 = vector.multi_reduction <add>, %3, %cst [0] : vector<8x128xf32> to vector<128xf32>
    %5 = vector.shape_cast %4 : vector<128xf32> to vector<1x128xf32>
    %6 = vector.shape_cast %5 : vector<1x128xf32> to vector<1x1x128xf32>
    %c0_3 = arith.constant 0 : index
    %c0_4 = arith.constant 0 : index
    %c0_5 = arith.constant 0 : index
    %7 = vector.load %arg3[%c0_3, %c0_4, %c0_5] : memref<1x1x128xf32, #tpu.memory_space<vmem>>, vector<1x1x128xf32>
    tpu.vector_store %arg3[%c0_3, %c0_4, %c0_5], %6 {strides = array<i32>} : memref<1x1x128xf32, #tpu.memory_space<vmem>>, vector<1x1x128xf32>,
    return
  }
  func.func @transform_0(%arg0: i32) -> (i32, i32) {
    %c0_i32 = arith.constant 0 : i32
    %c0_i32_0 = arith.constant 0 : i32
    return %arg0, %c0_i32 : i32, i32
  }
  func.func @transform_1(%arg0: i32) -> (i32, i32) {
    %c0_i32 = arith.constant 0 : i32
    %c0_i32_0 = arith.constant 0 : i32
    return %arg0, %c0_i32 : i32, i32
  }
  func.func @transform_2(%arg0: i32) -> (i32, i32, i32) {
    %c0_i32 = arith.constant 0 : i32
    %c0_i32_0 = arith.constant 0 : i32
    %c0_i32_1 = arith.constant 0 : i32
    return %arg0, %c0_i32, %c0_i32_0 : i32, i32, i32
  }
}

</mosaic_0001>

<llo_original>
// kernel: tpu_custom_call.1
$region0: #{tpu_custom_call.1}
  #allocation0 [shape = 'u32[]', space=smem, size = 0x4, offset = 0x4, fixed_abs, tag = 'smem constant byte address 0x4 - core index']
  #allocation1 [shape = 'u32[72,128]{1,0:T(1,128)}', space=vmem, size = 0x9000, scoped, tag = 'internal scratch']
  %s0 = inlined_call_operand.hbm [shape: f32[16,128], index: 0, kind: input, shape index: {}]
  %s1 = inlined_call_operand.hbm [shape: f32[16,128], index: 1, kind: input, shape index: {}]
  %s2 = inlined_call_operand.hbm [shape: f32[2,1,128], index: 2, kind: output, shape index: {}]
  %s3 = sld [smem:[#allocation0]]
  $region49: #{tpu_custom_call.1} parent=0
    _
  %s5 = ssub.s32 1, %s3
  %s6 = scalar_select 0, %s5, %s3
  $region1: #{tpu_custom_call.1} parent=0
    #allocation2 [shape = 'u8[8192]{0}', space=vmem, size = 0x2000, scoped, tag = 'input window, operand 0']
    #allocation3 [shape = 's32[2]{0}', space=sflag, size = 0x8, scoped, tag = 'scoped memory for tpu_custom_call.1']
    #allocation4 [shape = 's32[2]{0}', space=sflag, size = 0x8, scoped, tag = 'scoped memory for tpu_custom_call.1']
    #allocation5 [shape = 'u8[8192]{0}', space=vmem, size = 0x2000, scoped, tag = 'input window, operand 1']
    #allocation6 [shape = 's32[2]{0}', space=sflag, size = 0x8, scoped, tag = 'scoped memory for tpu_custom_call.1']
    #allocation7 [shape = 'u8[1024]{0}', space=vmem, size = 0x400, scoped, tag = 'output window, operand 0']
    %7 = vsyncpa [#allocation3], 0
    %s8 = scalar_lea.sflag [#allocation3], 1
    %9 = vsyncpa %s8, 0
    %10 = vsyncpa [#allocation6], 0
    %s11 = scalar_lea.sflag [#allocation6], 1
    %12 = vsyncpa %s11, 0
    %13 = vsyncpa [#allocation4], 0
    %s14 = scalar_lea.sflag [#allocation4], 1
    %15 = vsyncpa %s14, 0
    loop: start=0, step=1, limit=4
    $region2: #{tpu_custom_call.1} parent=1 // loop_pre_header
      _
    $region3: #{tpu_custom_call.1} parent=1 // loop_header
      %s17 = sphi 0, %s21
      %p18 = scmp.ge.s32.totalorder %s17, 4
      %s27 = sphi 0, %s29
      %s30 = sphi 0, %s27
      %s31 = sphi 0, %s30
      %s47 = sphi 0, %s31
      %s53 = sphi 0, %s55
      %s56 = sphi 0, %s53
      %s57 = sphi 0, %s56
      %s73 = sphi 0, %s57
      %s79 = sphi 0, %s81
      %s82 = sphi 0, %s79
      %s83 = sphi 0, %s82
      %s99 = sphi 0, %s83
    $region4: #{tpu_custom_call.1} parent=1 // loop_header_branch
      %20 = sbr.rel (%p18) target = $region8
    $region5: #{tpu_custom_call.1} parent=1 // loop_body
      %s22 = ssub.s32 %s17, 1
      %s23 = ssub.s32 %s17, 2
      %s24 = sadd.s32 %s17, 1
      %s25 = ssub.s32 %s17, %s24
      %p26 = scmp.eq.s32.totalorder %s25, 0
      %s28 = sadd.s32 %s27, 1
      %s29 = scalar_select %p26, %s27, %s28
      %p32 = pneg %p26
      %p33 = scmp.eq.s32.totalorder %s17, 1
      %p34 = por %p32, %p33
      %p35 = scmp.ne.s32.totalorder %s27, %s30
      %p36 = scmp.eq.s32.totalorder %s17, 0
      %p37 = por %p35, %p36
      %p38 = scmp.ne.s32.totalorder %s27, %s30
      %p39 = scmp.eq.s32.totalorder %s22, 1
      %p40 = por %p38, %p39
      %p41 = scmp.ne.s32.totalorder %s30, %s31
      %p42 = scmp.eq.s32.totalorder %s22, 0
      %p43 = por %p41, %p42
      %p44 = scmp.ne.s32.totalorder %s30, %s31
      %p45 = scmp.eq.s32.totalorder %s23, 1
      %p46 = por %p44, %p45
      %p48 = scmp.ne.s32.totalorder %s31, %s47
      %p49 = scmp.eq.s32.totalorder %s23, 0
      %p50 = por %p48, %p49
      %s51 = ssub.s32 %s17, %s24
      %p52 = scmp.eq.s32.totalorder %s51, 0
      %s54 = sadd.s32 %s53, 1
      %s55 = scalar_select %p52, %s53, %s54
      %p58 = pneg %p52
      %p59 = scmp.eq.s32.totalorder %s17, 1
      %p60 = por %p58, %p59
      %p61 = scmp.ne.s32.totalorder %s53, %s56
      %p62 = scmp.eq.s32.totalorder %s17, 0
      %p63 = por %p61, %p62
      %p64 = scmp.ne.s32.totalorder %s53, %s56
      %p65 = scmp.eq.s32.totalorder %s22, 1
      %p66 = por %p64, %p65
      %p67 = scmp.ne.s32.totalorder %s56, %s57
      %p68 = scmp.eq.s32.totalorder %s22, 0
      %p69 = por %p67, %p68
      %p70 = scmp.ne.s32.totalorder %s56, %s57
      %p71 = scmp.eq.s32.totalorder %s23, 1
      %p72 = por %p70, %p71
      %p74 = scmp.ne.s32.totalorder %s57, %s73
      %p75 = scmp.eq.s32.totalorder %s23, 0
      %p76 = por %p74, %p75
      %s77 = ssub.s32 %s17, %s24
      %p78 = scmp.eq.s32.totalorder %s77, 0
      %s80 = sadd.s32 %s79, 1
      %s81 = scalar_select %p78, %s79, %s80
      %p84 = pneg %p78
      %p85 = scmp.eq.s32.totalorder %s17, 1
      %p86 = por %p84, %p85
      %p87 = scmp.ne.s32.totalorder %s79, %s82
      %p88 = scmp.eq.s32.totalorder %s17, 0
      %p89 = por %p87, %p88
      %p90 = scmp.ne.s32.totalorder %s79, %s82
      %p91 = scmp.eq.s32.totalorder %s22, 1
      %p92 = por %p90, %p91
      %p93 = scmp.ne.s32.totalorder %s82, %s83
      %p94 = scmp.eq.s32.totalorder %s22, 0
      %p95 = por %p93, %p94
      %p96 = scmp.ne.s32.totalorder %s82, %s83
      %p97 = scmp.eq.s32.totalorder %s23, 1
      %p98 = por %p96, %p97
      %p100 = scmp.ne.s32.totalorder %s83, %s99
      %p101 = scmp.eq.s32.totalorder %s23, 0
      %p102 = por %p100, %p101
      %p103 = scmp.le.s32.totalorder 1, %s17
      %p104 = scmp.lt.s32.totalorder %s17, 3
      %p105 = pnand %p103, %p104
      %p106 = pneg %p105
      // Predicated region
      $region9: #{tpu_custom_call.1} parent=5 // pred_check
        _
      $region10: #{tpu_custom_call.1} parent=5 // pred_check_branch
        %108 = sbr.rel (%p105) target = $region12
      $region11: #{tpu_custom_call.1} parent=5 // pred_region
        %s109 = ssub.s32 %s17, 1
      $region12: #{tpu_custom_call.1} parent=5 // pred_fallthru
        _
      %p110 = scmp.lt.s32.totalorder %s17, 2
      // Predicated region
      $region13: #{tpu_custom_call.1} parent=5 // pred_check
        %p111 = pneg %p110
      $region14: #{tpu_custom_call.1} parent=5 // pred_check_branch
        %113 = sbr.rel (%p111) target = $region16
      $region15: #{tpu_custom_call.1} parent=5 // pred_region
        // Predicated region
        $region17: #{tpu_custom_call.1} parent=15 // pred_check
          %p114 = pneg %p37
        $region18: #{tpu_custom_call.1} parent=15 // pred_check_branch
          %116 = sbr.rel (%p114) target = $region20
        $region19: #{tpu_custom_call.1} parent=15 // pred_region
          %s117 = sand.u32 %s27, 1
          %s118 = scalar_lea.sflag [#allocation3], %s117
          %s119 = sand.u32 %s27, 1
          %s120 = smul.addr %s119, 8
          %s121 = scalar_lea.vmem [#allocation2], %s120
          %123 = vsyncadd %s118, 0
          %s124 = smul.addr %s17, 8
          %s125 = scalar_lea.hbm %s0, %s124
          %s127 = sshll.u32 %s125, 4
          %s128 = int_to_ptr.hbm [resolvable:$true] %s127
          %s129 = sshll.u32 %s121, 4
          %s130 = int_to_ptr.vmem [resolvable:$true] %s129
          %132 = dma.hbm_to_vmem [thread:$0]  %s128, 128, %s130, %s118
        $region20: #{tpu_custom_call.1} parent=15 // pred_fallthru
          _
        // Predicated region
        $region21: #{tpu_custom_call.1} parent=15 // pred_check
          %p133 = pneg %p63
        $region22: #{tpu_custom_call.1} parent=15 // pred_check_branch
          %135 = sbr.rel (%p133) target = $region24
        $region23: #{tpu_custom_call.1} parent=15 // pred_region
          %s136 = sand.u32 %s53, 1
          %s137 = scalar_lea.sflag [#allocation6], %s136
          %s138 = sand.u32 %s53, 1
          %s139 = smul.addr %s138, 8
          %s140 = scalar_lea.vmem [#allocation5], %s139
          %142 = vsyncadd %s137, 0
          %s143 = smul.addr %s17, 8
          %s144 = scalar_lea.hbm %s1, %s143
          %s146 = sshll.u32 %s144, 4
          %s147 = int_to_ptr.hbm [resolvable:$true] %s146
          %s148 = sshll.u32 %s140, 4
          %s149 = int_to_ptr.vmem [resolvable:$true] %s148
          %151 = dma.hbm_to_vmem [thread:$0]  %s147, 128, %s149, %s137
        $region24: #{tpu_custom_call.1} parent=15 // pred_fallthru
          _
      $region16: #{tpu_custom_call.1} parent=5 // pred_fallthru
        _
      %p152 = scmp.le.s32.totalorder 1, %s17
      %p153 = scmp.lt.s32.totalorder %s17, 3
      %p154 = pnand %p152, %p153
      %p155 = pneg %p154
      // Predicated region
      $region25: #{tpu_custom_call.1} parent=5 // pred_check
        _
      $region26: #{tpu_custom_call.1} parent=5 // pred_check_branch
        %157 = sbr.rel (%p154) target = $region28
      $region27: #{tpu_custom_call.1} parent=5 // pred_region
        %s158 = ssub.s32 %s17, 1
        %s159 = sand.u32 %s30, 1
        %s160 = scalar_lea.sflag [#allocation3], %s159
        %s161 = sand.u32 %s30, 1
        %s162 = smul.addr %s161, 8
        %s163 = scalar_lea.vmem [#allocation2], %s162
        // Predicated region
        $region29: #{tpu_custom_call.1} parent=27 // pred_check
          %p164 = pneg %p43
        $region30: #{tpu_custom_call.1} parent=27 // pred_check_branch
          %166 = sbr.rel (%p164) target = $region32
        $region31: #{tpu_custom_call.1} parent=27 // pred_region
          %168 = dma.done %s160, 128
        $region32: #{tpu_custom_call.1} parent=27 // pred_fallthru
          _
        %s169 = sand.u32 %s56, 1
        %s170 = scalar_lea.sflag [#allocation6], %s169
        %s171 = sand.u32 %s56, 1
        %s172 = smul.addr %s171, 8
        %s173 = scalar_lea.vmem [#allocation5], %s172
        // Predicated region
        $region33: #{tpu_custom_call.1} parent=27 // pred_check
          %p174 = pneg %p69
        $region34: #{tpu_custom_call.1} parent=27 // pred_check_branch
          %176 = sbr.rel (%p174) target = $region36
        $region35: #{tpu_custom_call.1} parent=27 // pred_region
          %178 = dma.done %s170, 128
        $region36: #{tpu_custom_call.1} parent=27 // pred_fallthru
          _
        %s179 = sand.u32 %s30, 1
        %s180 = scalar_lea.sflag [#allocation3], %s179
        %s181 = sand.u32 %s30, 1
        %s182 = smul.addr %s181, 8
        %s183 = scalar_lea.vmem [#allocation2], %s182
        %p184 = pneg %p43
        %p185 = pneg %p40
        %s186 = sand.u32 %s56, 1
        %s187 = scalar_lea.sflag [#allocation6], %s186
        %s188 = sand.u32 %s56, 1
        %s189 = smul.addr %s188, 8
        %s190 = scalar_lea.vmem [#allocation5], %s189
        %p191 = pneg %p69
        %p192 = pneg %p66
        %p193 = pneg %p95
        %p194 = pneg %p92
        %s195 = sand.u32 %s82, 1
        %s196 = scalar_lea.sflag [#allocation4], %s195
        %s197 = sand.u32 %s82, 1
        %s198 = scalar_lea.vmem [#allocation7], %s197
        %v199 = vld [vmem:[%s163] sm:$0xff]
        %v200 = vld [vmem:[%s173] sm:$0xff]
        %v201 = vsub.f32 %v199, %v200
        %v202 = vmul.f32 %v201, %v201
        %v203 = vrot.slane %v202, 4
        %v204 = vadd.f32 %v202, %v203
        %v205 = vrot.slane %v204, 2
        %v206 = vadd.f32 %v204, %v205
        %v207 = vrot.slane %v206, 1
        %v208 = vadd.f32 %v206, %v207
        %209 = vst [vmem:[%s198] sm:$0x1] %v208
        %s210 = sand.u32 %s82, 1
        %s211 = scalar_lea.sflag [#allocation4], %s210
        %s212 = sand.u32 %s82, 1
        %s213 = scalar_lea.vmem [#allocation7], %s212
        // Predicated region
        $region37: #{tpu_custom_call.1} parent=27 // pred_check
          %p214 = pneg %p92
        $region38: #{tpu_custom_call.1} parent=27 // pred_check_branch
          %216 = sbr.rel (%p214) target = $region40
        $region39: #{tpu_custom_call.1} parent=27 // pred_region
          %218 = vsyncadd %s211, 0
          %s219 = scalar_lea.hbm %s2, %s22
          %s221 = sshll.u32 %s213, 4
          %s222 = int_to_ptr.vmem [resolvable:$true] %s221
          %s223 = sshll.u32 %s219, 4
          %s224 = int_to_ptr.hbm [resolvable:$true] %s223
          %226 = dma.vmem_to_hbm [thread:$0]  %s222, 16, %s224, %s211
        $region40: #{tpu_custom_call.1} parent=27 // pred_fallthru
          _
      $region28: #{tpu_custom_call.1} parent=5 // pred_fallthru
        _
      %p227 = scmp.le.s32.totalorder 2, %s17
      // Predicated region
      $region41: #{tpu_custom_call.1} parent=5 // pred_check
        %p228 = pneg %p227
      $region42: #{tpu_custom_call.1} parent=5 // pred_check_branch
        %230 = sbr.rel (%p228) target = $region44
      $region43: #{tpu_custom_call.1} parent=5 // pred_region
        %s231 = ssub.s32 %s17, 2
        // Predicated region
        $region45: #{tpu_custom_call.1} parent=43 // pred_check
          %p232 = pneg %p98
        $region46: #{tpu_custom_call.1} parent=43 // pred_check_branch
          %234 = sbr.rel (%p232) target = $region48
        $region47: #{tpu_custom_call.1} parent=43 // pred_region
          %s235 = sand.u32 %s83, 1
          %s236 = scalar_lea.sflag [#allocation4], %s235
          %s237 = sand.u32 %s83, 1
          %s238 = scalar_lea.vmem [#allocation7], %s237
          %240 = dma.done %s236, 16
        $region48: #{tpu_custom_call.1} parent=43 // pred_fallthru
          _
      $region44: #{tpu_custom_call.1} parent=5 // pred_fallthru
        _
    $region6: #{tpu_custom_call.1} parent=1 // loop_footer
      %s21 = sadd.s32 1, %s17
    $region7: #{tpu_custom_call.1} parent=1 // loop_footer_branch
      %16 = sbr.rel target = $region3
    $region8: #{tpu_custom_call.1} parent=1 // loop_exit
      _
    %241 = vsyncpa [#allocation3], 1
    %s242 = scalar_lea.sflag [#allocation3], 1
    %243 = vsyncpa %s242, 1
    %244 = vsyncpa [#allocation6], 1
    %s245 = scalar_lea.sflag [#allocation6], 1
    %246 = vsyncpa %s245, 1
    %247 = vsyncpa [#allocation4], 1
    %s248 = scalar_lea.sflag [#allocation4], 1
    %249 = vsyncpa %s248, 1

</llo_original>
